<compile_context>
chip_gen: v6e
topology: v6e:2x2x1
jax: 0.10.0
libtpu: 0.0.40
codegen_flags: <defaults>
</compile_context>

<pallas_src>
import jax
import jax.numpy as jnp
from jax import lax
from jax.experimental import pallas as pl
from jax.experimental.pallas import tpu as pltpu

HIDDEN_DIM = 20

MAX_BATCH_TILE = 65536          # lane cap per grid step
TILE_VMEM_BUDGET = 24 << 20     # bytes budgeted for double-buffered x + out tiles
SMALL_BATCH_THRESHOLD = 4096    # below this, plain fused XLA is faster than pallas_call


def critic_kernel(xt_ref, w1t_ref, b1_ref, w2_ref, b2_ref, out_ref):
    # xt_ref : (F, TB)   input tile (bf16), batch on the lane axis
    # w1t_ref: (H, F)    fc1 weight (bf16, PyTorch (out, in) layout)
    # b1_ref : (H, 1)    fc1 bias as a column (f32)
    # w2_ref : (H, 1)    out-layer weight as a column (f32)
    # b2_ref : (1, 1)    out-layer bias, SMEM scalar (f32)
    # out_ref: (1, TB)   value tile, lane-dense (f32)
    h = jnp.dot(w1t_ref[...], xt_ref[...], preferred_element_type=jnp.float32)  # (H, TB) f32
    h = jnp.maximum(h + b1_ref[...], 0.0)                                       # ReLU(fc1), f32
    # Second layer (H -> 1): VPU multiply + sublane reduce instead of a K=20,N=1 MXU pass.
    v = jnp.sum(h * w2_ref[...], axis=0, keepdims=True)                         # (1, TB)
    out_ref[...] = v + b2_ref[0, 0]


def _round_up(n, m):
    return ((n + m - 1) // m) * m


def _min_grid_steps():
    # v7x has 2 TensorCores: keep >=4 batch tiles so dimension_semantics=("parallel",)
    # can shard them. v5e/v6e have 1 TC: a single big tile is optimal.
    try:
        kind = jax.devices()[0].device_kind.lower()
    except Exception:
        return 1
    return 4 if "v7" in kind else 1


def _choose_batch_tile(B, F, x_itemsize, min_steps):
    # Double-buffered input tile + double-buffered f32 output tile, per lane.
    per_lane = 2 * F * x_itemsize + 2 * 4
    tb = TILE_VMEM_BUDGET // per_lane
    tb = min(tb, MAX_BATCH_TILE, _round_up(B, 128))
    if min_steps > 1:
        tb = min(tb, _round_up(pl.cdiv(B, min_steps), 128))
    tb = max(128, (tb // 128) * 128)
    return int(tb)


def _critic_xla(x, w1, b1, w2, b2):
    # Fused-XLA fast path (f32) for small batches.
    x = x.astype(jnp.float32)
    return jnp.maximum(x @ w1 + b1, 0.0) @ w2 + b2


def critic_forward(x, w1, b1, w2, b2, *, use_pallas=None, x_dtype=jnp.bfloat16):
    """x: (B, F); w1: (F, H); b1: (1, H); w2: (H, 1); b2: (1, 1). Returns (B, 1) f32."""
    B, F = x.shape
    H = w1.shape[1]

    if use_pallas is None:
        use_pallas = B >= SMALL_BATCH_THRESHOLD
    if not use_pallas:
        return _critic_xla(x, w1, b1, w2, b2)

    x_itemsize = jnp.dtype(x_dtype).itemsize
    min_steps = _min_grid_steps()
    tb = _choose_batch_tile(B, F, x_itemsize, min_steps)
    Bp = _round_up(B, tb)
    grid = Bp // tb

    # Single fused transpose+pad (no zeros+scatter materialization), staged at bf16.
    xt = lax.pad(
        jnp.transpose(x).astype(x_dtype),
        jnp.zeros((), x_dtype),
        ((0, 0, 0), (0, Bp - B, 0)),
    )                                                   # (F, Bp)
    w1t = jnp.transpose(w1).astype(x_dtype)             # (H, F) -> MXU in bf16
    b1c = jnp.reshape(b1, (H, 1)).astype(jnp.float32)
    w2c = jnp.reshape(w2, (H, 1)).astype(jnp.float32)
    b2s = jnp.reshape(b2, (1, 1)).astype(jnp.float32)

    # Explicit scoped-VMEM sizing: double-buffered x tile + out tile + resident weights,
    # clamped to stay well under v7x's 64 MiB physical VMEM.
    tile_bytes = 2 * F * tb * x_itemsize + 2 * tb * 4
    weight_bytes = H * F * x_itemsize + 2 * H * 4 + 4
    vmem_limit = int(min(max(2 * (tile_bytes + weight_bytes) + (4 << 20), 16 << 20), 48 << 20))

    out_t = pl.pallas_call(
        critic_kernel,
        out_shape=jax.ShapeDtypeStruct((1, Bp), jnp.float32),
        grid=(grid,),
        in_specs=[
            pl.BlockSpec((F, tb), lambda i: (0, i)),            # x tile, streamed over batch
            pl.BlockSpec((H, F), lambda i: (0, 0)),             # weights stay VMEM-resident
            pl.BlockSpec((H, 1), lambda i: (0, 0)),
            pl.BlockSpec((H, 1), lambda i: (0, 0)),
            pl.BlockSpec(memory_space=pltpu.MemorySpace.SMEM),  # b2 scalar in SMEM
        ],
        out_specs=pl.BlockSpec((1, tb), lambda i: (0, i)),
        compiler_params=pltpu.CompilerParams(
            dimension_semantics=("parallel",),
            vmem_limit_bytes=vmem_limit,
        ),
    )(xt, w1t, b1c, w2c, b2s)

    return jnp.transpose(out_t[:, :B])  # (B, 1)


def init_params(key, n_features):
    # Mirrors the module __init__: weights ~ N(0, 0.1); biases use PyTorch's
    # default Linear init U(-1/sqrt(fan_in), 1/sqrt(fan_in)).
    k1, k2, k3, k4 = jax.random.split(key, 4)
    w1 = 0.1 * jax.random.normal(k1, (n_features, HIDDEN_DIM), dtype=jnp.float32)
    b1 = jax.random.uniform(
        k2, (1, HIDDEN_DIM), dtype=jnp.float32,
        minval=-1.0 / jnp.sqrt(n_features), maxval=1.0 / jnp.sqrt(n_features))
    w2 = 0.1 * jax.random.normal(k3, (HIDDEN_DIM, 1), dtype=jnp.float32)
    b2 = jax.random.uniform(
        k4, (1, 1), dtype=jnp.float32,
        minval=-1.0 / jnp.sqrt(HIDDEN_DIM), maxval=1.0 / jnp.sqrt(HIDDEN_DIM))
    return w1, b1, w2, b2


def _pallas_path_ref(x, w1, b1, w2, b2):
    # Reference matching the Pallas path's bf16 rounding of the MXU operands
    # (accumulation and everything downstream is f32 in the kernel).
    xb = x.astype(jnp.bfloat16).astype(jnp.float32)
    wb = w1.astype(jnp.bfloat16).astype(jnp.float32)
    return jnp.maximum(xb @ wb + b1, 0.0) @ w2 + b2


if __name__ == "__main__":
    key = jax.random.PRNGKey(0)
    kx, kp, kx2 = jax.random.split(key, 3)

    batch, n_features = 2, 4
    x = jax.random.normal(kx, (batch, n_features), dtype=jnp.float32)
    w1, b1, w2, b2 = init_params(kp, n_features)

    # Force the Pallas path at small shape to exercise the kernel itself.
    value = critic_forward(x, w1, b1, w2, b2, use_pallas=True)
    jax.block_until_ready(value)
    ref = _pallas_path_ref(x, w1, b1, w2, b2)
    assert value.shape == (batch, 1)
    assert jnp.allclose(value, ref, atol=1e-4, rtol=1e-4)

    # Auto dispatch at small batch takes the fused-XLA fast path (f32).
    value_fast = critic_forward(x, w1, b1, w2, b2)
    jax.block_until_ready(value_fast)
    ref_f32 = jnp.maximum(x @ w1 + b1, 0.0) @ w2 + b2
    assert jnp.allclose(value_fast, ref_f32, atol=1e-5, rtol=1e-5)

    # Larger, non-multiple-of-tile batch: auto dispatch hits the Pallas path and
    # exercises the grid + padding + big-tile sizing.
    big_batch = 10000
    xb = jax.random.normal(kx2, (big_batch, n_features), dtype=jnp.float32)
    vb = critic_forward(xb, w1, b1, w2, b2)
    jax.block_until_ready(vb)
    refb = _pallas_path_ref(xb, w1, b1, w2, b2)
    assert vb.shape == (big_batch, 1)
    assert jnp.allclose(vb, refb, atol=1e-4, rtol=1e-4)

    print("KERNEL_OK")
</pallas_src>

<mosaic_0001>
module attributes {stable_mosaic.version = 11 : i64} {
  func.func @critic_kernel(%arg0: i32, %arg1: memref<4x128xbf16, #tpu.memory_space<vmem>>, %arg2: memref<20x4xbf16, #tpu.memory_space<vmem>>, %arg3: memref<20x1xf32, #tpu.memory_space<vmem>>, %arg4: memref<20x1xf32, #tpu.memory_space<vmem>>, %arg5: memref<1x1xf32, #tpu.memory_space<smem>>, %arg6: memref<1x128xf32, #tpu.memory_space<vmem>>) attributes {dimension_semantics = [#tpu.dimension_semantics<parallel>], iteration_bounds = array<i64: 1>, scalar_prefetch = 0 : i64, scratch_operands = 0 : i64, tpu.core_type = #tpu.core_type<tc>, window_params = [{transform_indices = @transform_0, window_bounds = array<i64: 4, 128>}, {pipeline_mode = #tpu.pipeline_mode<synchronous>, transform_indices = @transform_1, window_bounds = array<i64: 20, 4>}, {pipeline_mode = #tpu.pipeline_mode<synchronous>, transform_indices = @transform_2, window_bounds = array<i64: 20, 1>}, {pipeline_mode = #tpu.pipeline_mode<synchronous>, transform_indices = @transform_3, window_bounds = array<i64: 20, 1>}, {transform_indices = @transform_4, window_bounds = array<i64: 1, 1>}, {transform_indices = @transform_5, window_bounds = array<i64: 1, 128>}]} {
    %c0 = arith.constant 0 : index
    %c0_0 = arith.constant 0 : index
    %0 = vector.load %arg2[%c0, %c0_0] : memref<20x4xbf16, #tpu.memory_space<vmem>>, vector<20x4xbf16>
    %c0_1 = arith.constant 0 : index
    %c0_2 = arith.constant 0 : index
    %1 = vector.load %arg1[%c0_1, %c0_2] : memref<4x128xbf16, #tpu.memory_space<vmem>>, vector<4x128xbf16>
    %cst = arith.constant dense<0.000000e+00> : vector<20x128xf32>
    %2 = tpu.matmul %0, %1, %cst {dimension_numbers = #tpu.dot_dimension_numbers<[1], [0], [0], [1], [0, 0, 1, 1], [], []>} : vector<20x4xbf16>, vector<4x128xbf16>, vector<20x128xf32> -> vector<20x128xf32>
    %c0_3 = arith.constant 0 : index
    %c0_4 = arith.constant 0 : index
    %3 = vector.load %arg3[%c0_3, %c0_4] : memref<20x1xf32, #tpu.memory_space<vmem>>, vector<20x1xf32>
    %4 = vector.broadcast %3 : vector<20x1xf32> to vector<20x128xf32>
    %5 = arith.addf %2, %4 : vector<20x128xf32>
    %cst_5 = arith.constant 0.000000e+00 : f32
    %6 = vector.broadcast %cst_5 : f32 to vector<20x128xf32>
    %7 = arith.maximumf %5, %6 : vector<20x128xf32>
    %c0_6 = arith.constant 0 : index
    %c0_7 = arith.constant 0 : index
    %8 = vector.load %arg4[%c0_6, %c0_7] : memref<20x1xf32, #tpu.memory_space<vmem>>, vector<20x1xf32>
    %9 = vector.broadcast %8 : vector<20x1xf32> to vector<20x128xf32>
    %10 = arith.mulf %7, %9 : vector<20x128xf32>
    %cst_8 = arith.constant dense<0.000000e+00> : vector<128xf32>
    %11 = vector.multi_reduction <add>, %10, %cst_8 [0] : vector<20x128xf32> to vector<128xf32>
    %12 = vector.shape_cast %11 : vector<128xf32> to vector<1x128xf32>
    %c0_9 = arith.constant 0 : index
    %c0_10 = arith.constant 0 : index
    %13 = memref.load %arg5[%c0_9, %c0_10] : memref<1x1xf32, #tpu.memory_space<smem>>
    %14 = vector.broadcast %13 : f32 to vector<1x128xf32>
    %15 = arith.addf %12, %14 : vector<1x128xf32>
    %c0_11 = arith.constant 0 : index
    %c0_12 = arith.constant 0 : index
    %16 = vector.load %arg6[%c0_11, %c0_12] : memref<1x128xf32, #tpu.memory_space<vmem>>, vector<1x128xf32>
    tpu.vector_store %arg6[%c0_11, %c0_12], %15 {strides = array<i32>} : memref<1x128xf32, #tpu.memory_space<vmem>>, vector<1x128xf32>,
    return
  }
  func.func @transform_0(%arg0: i32) -> (i32, i32) {
    %c0_i32 = arith.constant 0 : i32
    %c0_i32_0 = arith.constant 0 : i32
    return %c0_i32, %arg0 : i32, i32
  }
  func.func @transform_1(%arg0: i32) -> (i32, i32) {
    %c0_i32 = arith.constant 0 : i32
    %c0_i32_0 = arith.constant 0 : i32
    %c0_i32_1 = arith.constant 0 : i32
    return %c0_i32, %c0_i32_0 : i32, i32
  }
  func.func @transform_2(%arg0: i32) -> (i32, i32) {
    %c0_i32 = arith.constant 0 : i32
    %c0_i32_0 = arith.constant 0 : i32
    %c0_i32_1 = arith.constant 0 : i32
    return %c0_i32, %c0_i32_0 : i32, i32
  }
  func.func @transform_3(%arg0: i32) -> (i32, i32) {
    %c0_i32 = arith.constant 0 : i32
    %c0_i32_0 = arith.constant 0 : i32
    %c0_i32_1 = arith.constant 0 : i32
    return %c0_i32, %c0_i32_0 : i32, i32
  }
  func.func @transform_4(%arg0: i32) -> (i32, i32) {
    %c0_i32 = arith.constant 0 : i32
    %c0_i32_0 = arith.constant 0 : i32
    %c0_i32_1 = arith.constant 0 : i32
    return %c0_i32, %c0_i32_0 : i32, i32
  }
  func.func @transform_5(%arg0: i32) -> (i32, i32) {
    %c0_i32 = arith.constant 0 : i32
    %c0_i32_0 = arith.constant 0 : i32
    return %c0_i32, %arg0 : i32, i32
  }
}

</mosaic_0001>

<llo_original>
// kernel: tpu_custom_call.1
$region0: #{tpu_custom_call.1}
  #allocation0 [shape = 'u32[]', space=smem, size = 0x4, offset = 0x4, fixed_abs, tag = 'smem constant byte address 0x4 - core index']
  #allocation1 [shape = 'u32[144,128]{1,0:T(1,128)}', space=vmem, size = 0x12000, scoped, tag = 'internal scratch']
  #allocation2 [shape = 'f32[1,1]{1,0:T(1,128)S(6)}', space=smem, size = 0x200, scoped, tag = 'scoped memory for tpu_custom_call.1']
  %s0 = inlined_call_operand.vmem [shape: bf16[4,128], index: 0, kind: input, shape index: {}]
  %s1 = inlined_call_operand.vmem [shape: bf16[20,4], index: 1, kind: input, shape index: {}]
  %s2 = inlined_call_operand.vmem [shape: f32[20,1], index: 2, kind: input, shape index: {}]
  %s3 = inlined_call_operand.vmem [shape: f32[20,1], index: 3, kind: input, shape index: {}]
  %s4 = inlined_call_operand.<no memory space> [shape: f32[1,1], index: 4, kind: input, shape index: {}]
  %s5 = inlined_call_operand.hbm [shape: f32[1,128], index: 5, kind: output, shape index: {}]
  %s6 = sld [smem:[#allocation0]]
  $region30: #{tpu_custom_call.1} parent=0
    _
  %s8 = ssub.s32 1, %s6
  %s9 = scalar_select 0, %s8, %s6
  %10 = sst [smem:[#allocation2]] %s4
  $region1: #{tpu_custom_call.1} parent=0
    #allocation3 [shape = 'u8[512]{0}', space=vmem, size = 0x400, scoped, tag = 'output window, operand 0, single buffered']
    #allocation4 [shape = 's32[1]{0}', space=sflag, size = 0x4, scoped, tag = 'scoped memory for tpu_custom_call.1']
    %11 = vsyncpa [#allocation4], 0
    // Predicated region
    $region2: #{tpu_custom_call.1} parent=1 // pred_check
      _
    $region3: #{tpu_custom_call.1} parent=1 // pred_check_branch
      %13 = sbr.rel (0) target = $region5
    $region4: #{tpu_custom_call.1} parent=1 // pred_region
      _
    $region5: #{tpu_custom_call.1} parent=1 // pred_fallthru
      _
    // Predicated region
    $region6: #{tpu_custom_call.1} parent=1 // pred_check
      _
    $region7: #{tpu_custom_call.1} parent=1 // pred_check_branch
      %15 = sbr.rel (0) target = $region9
    $region8: #{tpu_custom_call.1} parent=1 // pred_region
      _
    $region9: #{tpu_custom_call.1} parent=1 // pred_fallthru
      _
    // Predicated region
    $region10: #{tpu_custom_call.1} parent=1 // pred_check
      _
    $region11: #{tpu_custom_call.1} parent=1 // pred_check_branch
      %17 = sbr.rel (0) target = $region13
    $region12: #{tpu_custom_call.1} parent=1 // pred_region
      _
    $region13: #{tpu_custom_call.1} parent=1 // pred_fallthru
      _
    // Predicated region
    $region14: #{tpu_custom_call.1} parent=1 // pred_check
      _
    $region15: #{tpu_custom_call.1} parent=1 // pred_check_branch
      %19 = sbr.rel (0) target = $region17
    $region16: #{tpu_custom_call.1} parent=1 // pred_region
      _
    $region17: #{tpu_custom_call.1} parent=1 // pred_fallthru
      _
    // Predicated region
    $region18: #{tpu_custom_call.1} parent=1 // pred_check
      _
    $region19: #{tpu_custom_call.1} parent=1 // pred_check_branch
      %21 = sbr.rel (0) target = $region21
    $region20: #{tpu_custom_call.1} parent=1 // pred_region
      _
    $region21: #{tpu_custom_call.1} parent=1 // pred_fallthru
      _
    %v23 = vld [vmem:[%s1] sm:$0xf]
    %v24 = vld [vmem:[%s1 + $0x4] sm:$0xf]
    %v25 = vld [vmem:[%s1 + $0x8] sm:$0x3]
    %v26 = vld [vmem:[%s0] sm:$0x3]
    %v27 = vld [vmem:[%s2] sm:$0xff]
    %v28 = vld [vmem:[%s2 + $0x8] sm:$0xff]
    %v29 = vld [vmem:[%s2 + $0x10] sm:$0xf]
    %31 = vset.pattern.permute.xlu0 0
    %32 = vperm.xlu0 %31, %v27
    %v33 = vpop.permute.xlu0 %32
    %36 = vset.pattern.permute.xlu0 0
    %37 = vperm.xlu0 %36, %v28
    %v38 = vpop.permute.xlu0 %37
    %41 = vset.pattern.permute.xlu0 0
    %42 = vperm.xlu0 %41, %v29
    %v43 = vpop.permute.xlu0 %42
    %v48 = vunpack.c.l.b16 %v23
    %v49 = vunpack.c.l.b16 %v24
    %v50 = vunpack.c.l.b16 %v25
    %v51 = vpack.c.b16 %v49, %v48
    %v52 = vpack.c.b16 %v50, %v50
    %vm53 = vcmask 31744
    %v55 = vsel %vm53, %v51, 0
    %v58 = vsel %vm53, %v52, 0
    %vm60 = vcmask 1041408
    %v62 = vsel %vm60, %v26, 0
    %64 = vmatprep.subr.bf16.mxu0 0
    %65 = vmatpush1.bf16.msra.mxu0 0
    %66 = vmatprep.subr.bf16.mxu0 0
    %67 = vmatpush1.bf16.msra.mxu0 0
    %68 = vmatprep.subr.bf16.mxu0 0
    %69 = vmatpush1.bf16.msra.mxu0 0
    %70 = vmatprep.subr.bf16.mxu0 0
    %71 = vmatpush1.bf16.msra.mxu0 0
    %72 = vmatprep.subr.bf16.mxu0 0
    %73 = vmatpush1.bf16.msra.mxu0 0
    %74 = vmatprep.subr.bf16.mxu0 0
    %75 = vmatpush1.bf16.msra.mxu0 0
    %76 = vmatprep.subr.bf16.mxu0 0
    %77 = vmatpush1.bf16.msra.mxu0 0
    %78 = vmatprep.subr.bf16.mxu0 0
    %79 = vmatpush1.bf16.msra.mxu0 %v62
    %80 = vmatprep.subr.bf16.mxu0 0
    %81 = vmatpush2.bf16.msra.mxu0 0
    %82 = vmatprep.subr.bf16.mxu0 0
    %83 = vmatpush2.bf16.msra.mxu0 0
    %84 = vmatprep.subr.bf16.mxu0 0
    %85 = vmatpush2.bf16.msra.mxu0 0
    %86 = vmatprep.subr.bf16.mxu0 0
    %87 = vmatpush2.bf16.msra.mxu0 0
    %88 = vmatprep.subr.bf16.mxu0 0
    %89 = vmatpush2.bf16.msra.mxu0 0
    %90 = vmatprep.subr.bf16.mxu0 0
    %91 = vmatpush2.bf16.msra.mxu0 0
    %92 = vmatprep.subr.bf16.mxu0 0
    %93 = vmatpush2.bf16.msra.mxu0 0
    %94 = vmatprep.subr.bf16.mxu0 0
    %95 = vmatpush2.bf16.msra.mxu0 0
    %96 = vmatprep.mubr.bf16.mxu0 0
    %97 = vmatmul.mubr.bf16.gmra.mxu0 %v55
    %v98 = vpop.f32.mrf.mxu0
    %v99 = vadd.f32 %v33, %v98
    %v100 = vpop.f32.mrf.mxu0
    %v101 = vpop.f32.mrf.mxu0
    %v102 = vadd.f32 %v38, %v101
    %v103 = vpop.f32.mrf.mxu0
    %104 = vmatprep.mubr.bf16.mxu0 0
    %105 = vmatmul.mubr.bf16.gmra.mxu0 %v58
    %v106 = vpop.f32.mrf.mxu0
    %v107 = vadd.f32 %v43, %v106
    %v108 = vpop.f32.mrf.mxu0
    %v109 = vpop.f32.mrf.mxu0
    %v110 = vpop.f32.mrf.mxu0
    %111 = vdwg.mxu0
    %v112 = vmax.f32 %v99, 0.0
    %v113 = vmax.f32 %v102, 0.0
    %v114 = vmax.f32 %v107, 0.0
    %v115 = vld [vmem:[%s3] sm:$0xff]
    %v116 = vld [vmem:[%s3 + $0x8] sm:$0xff]
    %v117 = vld [vmem:[%s3 + $0x10] sm:$0xf]
    %119 = vset.pattern.permute.xlu0 0
    %120 = vperm.xlu0 %119, %v115
    %v121 = vpop.permute.xlu0 %120
    %124 = vset.pattern.permute.xlu0 0
    %125 = vperm.xlu0 %124, %v116
    %v126 = vpop.permute.xlu0 %125
    %129 = vset.pattern.permute.xlu0 0
    %130 = vperm.xlu0 %129, %v117
    %v131 = vpop.permute.xlu0 %130
    %v133 = vmul.f32 %v112, %v121
    %v134 = vmul.f32 %v113, %v126
    %v135 = vmul.f32 %v114, %v131
    %v136 = vadd.f32 %v133, %v134
    %vm137 = vcmask 1043456
    %v138 = vsel %vm137, %v135, 0.0
    %v139 = vadd.f32 %v136, %v138
    %v140 = vrot.slane %v139, 4
    %v141 = vadd.f32 %v139, %v140
    %v142 = vrot.slane %v141, 2
    %v143 = vadd.f32 %v141, %v142
    %v144 = vrot.slane %v143, 1
    %v145 = vadd.f32 %v143, %v144
    %s146 = sld [smem:[#allocation2]]
    %v147 = vstv %s146
    %v148 = vadd.f32 %v145, %v147
    %149 = vst [vmem:[#allocation3] sm:$0x1] %v148
    // Predicated region
    $region22: #{tpu_custom_call.1} parent=1 // pred_check
      _
    $region23: #{tpu_custom_call.1} parent=1 // pred_check_branch
      %151 = sbr.rel (0) target = $region25
    $region24: #{tpu_custom_call.1} parent=1 // pred_region
      %s153 = ssub.s32 16, 16
      %154 = vsyncadd [#allocation4], %s153
      %s156 = sshll.u32 [#allocation3], 4
      %s157 = int_to_ptr.vmem [resolvable:$true] %s156
      %159 = dma.vmem_to_hbm [thread:$0]  %s157, 16, %s5, [#allocation4]
    $region25: #{tpu_custom_call.1} parent=1 // pred_fallthru
      _
    // Predicated region
    $region26: #{tpu_custom_call.1} parent=1 // pred_check
      _
    $region27: #{tpu_custom_call.1} parent=1 // pred_check_branch
      %161 = sbr.rel (0) target = $region29
    $region28: #{tpu_custom_call.1} parent=1 // pred_region
      %162 = dma.done [#allocation4], 16
    $region29: #{tpu_custom_call.1} parent=1 // pred_fallthru
      _
    %163 = vsyncpa [#allocation4], 1

</llo_original>
